<compile_context>
chip_gen: v6e
topology: v6e:2x2x1
jax: 0.10.0
libtpu: 0.0.40
codegen_flags: <defaults>
</compile_context>

<pallas_src>
import functools
import numpy as np
import jax
import jax.numpy as jnp
from jax.experimental import pallas as pl
from jax.experimental.pallas import tpu as pltpu

_LANES = 1024     # lane width, kernel 1 (flat elementwise)
_ROW_TILE = 128   # sublane rows per grid step, kernel 1 (512 KiB f32 blocks)
_TN = 256         # points per tile (K dim of the matmul), kernel 2
_TM = 256         # voxels per output tile (lane dim), kernel 2


def _round_up(x, m):
    return (x + m - 1) // m * m


# ----------------------------------------------------------------------------------
# Pallas kernel 1: voxel grid coordinates (elementwise, fully dense flat layout)
# ----------------------------------------------------------------------------------
def _grid_kernel(coord_ref, start_ref, out_ref, *, voxel_size):
    out_ref[...] = jnp.floor(
        (coord_ref[...] - start_ref[...]) / voxel_size).astype(jnp.int32)


def voxel_grid_coords(coord, start_pp, voxel_size):
    """coord, start_pp: [N, 3] f32 -> [N, 3] int32 voxel grid coordinates."""
    n = coord.shape[0]
    flat_len = 3 * n
    l_pad = _round_up(max(flat_len, 8 * _LANES), 8 * _LANES)
    rows = l_pad // _LANES
    row_tile = min(rows, _ROW_TILE)
    if rows % row_tile:
        rows = _round_up(rows, row_tile)
        l_pad = rows * _LANES
    flat_c = (jnp.zeros((l_pad,), jnp.float32)
              .at[:flat_len].set(coord.reshape(-1)).reshape(rows, _LANES))
    flat_s = (jnp.zeros((l_pad,), jnp.float32)
              .at[:flat_len].set(start_pp.reshape(-1)).reshape(rows, _LANES))
    out = pl.pallas_call(
        functools.partial(_grid_kernel, voxel_size=float(voxel_size)),
        out_shape=jax.ShapeDtypeStruct((rows, _LANES), jnp.int32),
        grid=(rows // row_tile,),
        in_specs=[pl.BlockSpec((row_tile, _LANES), lambda i: (i, 0)),
                  pl.BlockSpec((row_tile, _LANES), lambda i: (i, 0))],
        out_specs=pl.BlockSpec((row_tile, _LANES), lambda i: (i, 0)),
        compiler_params=pltpu.CompilerParams(dimension_semantics=("parallel",)),
    )(flat_c, flat_s)
    return out.reshape(-1)[:flat_len].reshape(n, 3)


# ----------------------------------------------------------------------------------
# Pallas kernel 2: segment mean (segment_csr reduce='mean') over voxel-sorted points
# ----------------------------------------------------------------------------------
def _segmean_kernel(nstart_ref, ncount_ref, lo_ref, hi_ref, coord_ref, out_ref, *, tn, tm):
    m = pl.program_id(0)
    j = pl.program_id(1)

    @pl.when(j == 0)
    def _init():
        out_ref[...] = jnp.zeros_like(out_ref)

    @pl.when(j < ncount_ref[m])
    def _accumulate():
        n_tile = nstart_ref[m] + j
        # global (sorted) point index of every row of this N-tile
        gj = jax.lax.broadcasted_iota(jnp.int32, (tn, tm), 0) + n_tile * tn
        lo = lo_ref[...]                                                    # [1, tm]
        hi = hi_ref[...]                                                    # [1, tm]
        onehot = jnp.logical_and(gj >= lo, gj < hi).astype(jnp.float32)     # [tn, tm]
        out_ref[...] += jnp.dot(coord_ref[...], onehot,
                                preferred_element_type=jnp.float32)         # [8, tm]

    @pl.when(j == pl.num_programs(1) - 1)
    def _finalize():
        acc = out_ref[...]                          # rows 0..2 sums, row 3 counts
        cnt = jnp.maximum(acc[3:4, :], 1.0)         # guard padded / empty columns
        inv = pl.reciprocal(cnt, approx=True)
        inv = inv * (2.0 - cnt * inv)               # one Newton step -> ~f32-exact mean
        out_ref[...] = acc * inv


def segment_mean_sorted(coord4_t, ptr_lo, ptr_hi, nstart, ncount, max_steps):
    """coord4_t: [8, N_pad] f32 (rows 0..2 xyz of voxel-sorted points, row 3 = ones).
       ptr_lo/ptr_hi: [1, M_pad] int32 CSR boundaries.  Returns [8, M_pad] f32."""
    _, n_pad = coord4_t.shape
    _, m_pad = ptr_lo.shape
    n_tiles = n_pad // _TN
    m_blocks = m_pad // _TM

    def coord_map(m, j, ns, nc):
        # Clamp to the last useful tile of this M block: steps past ncount keep the
        # same block index, so the pipeline skips the redundant DMA.
        idx = ns[m] + jnp.minimum(j, nc[m] - 1)
        return (0, jnp.minimum(idx, n_tiles - 1))

    grid_spec = pltpu.PrefetchScalarGridSpec(
        num_scalar_prefetch=2,
        grid=(m_blocks, max_steps),
        in_specs=[
            pl.BlockSpec((1, _TM), lambda m, j, ns, nc: (0, m)),          # ptr_lo
            pl.BlockSpec((1, _TM), lambda m, j, ns, nc: (0, m)),          # ptr_hi
            pl.BlockSpec((8, _TN), coord_map),                            # coord tile
        ],
        out_specs=pl.BlockSpec((8, _TM), lambda m, j, ns, nc: (0, m)),    # resident over j
    )
    return pl.pallas_call(
        functools.partial(_segmean_kernel, tn=_TN, tm=_TM),
        out_shape=jax.ShapeDtypeStruct((8, m_pad), jnp.float32),
        grid_spec=grid_spec,
        compiler_params=pltpu.CompilerParams(
            dimension_semantics=("parallel", "arbitrary")),
    )(nstart, ncount, ptr_lo, ptr_hi, coord4_t)


# ----------------------------------------------------------------------------------
# VSampling module
# ----------------------------------------------------------------------------------
class VSampling:
    """Voxel sampling: returns (n_p [M,3], n_o [B], (sorted_cluster_indices, idx_ptr))."""

    def __init__(self, voxel_size, **kwargs):
        self.voxel_size = float(voxel_size)

    def __call__(self, input_dict, start=None):
        coord = jnp.asarray(input_dict['p'], jnp.float32)              # [N, 3]
        offset = jnp.asarray(input_dict['o'], jnp.int32)               # [B] cumulative counts
        n = coord.shape[0]
        b = offset.shape[0]

        # offset -> per-point batch index (pointops.offset2batch), on device
        batch = jnp.searchsorted(offset, jnp.arange(n, dtype=jnp.int32),
                                 side='right').astype(jnp.int32)       # [N]

        # start defaults to per-batch coordinate minimum (voxelize_helper default)
        if start is None:
            start_pb = jax.ops.segment_min(coord, batch, num_segments=b)
        else:
            start_pb = jnp.asarray(start, jnp.float32)
            if start_pb.ndim == 1:
                start_pb = jnp.broadcast_to(start_pb, (b, 3))
        start_pp = start_pb[batch]                                     # [N, 3]

        # ---- Pallas kernel 1: voxel grid coordinates ----
        gc = voxel_grid_coords(coord, start_pp, self.voxel_size)       # [N, 3] int32

        # cluster key (batch, gx, gy, gz); shift so grid coords are non-negative
        gc = gc - gc.min(axis=0, keepdims=True)
        gmax = gc.max(axis=0) + 1
        key = ((batch * gmax[0] + gc[:, 0]) * gmax[1] + gc[:, 1]) * gmax[2] + gc[:, 2]
        sorted_idx = jnp.argsort(key, stable=True)
        sorted_key = key[sorted_idx]
        change = jnp.concatenate([jnp.zeros((1,), jnp.int32),
                                  (jnp.diff(sorted_key) != 0).astype(jnp.int32)])
        seg_id = jnp.cumsum(change)                                    # voxel id per sorted point
        m = int(seg_id[-1]) + 1                                        # host sync: dynamic voxel count
        idx_ptr = jnp.searchsorted(seg_id, jnp.arange(m + 1, dtype=jnp.int32),
                                   side='left').astype(jnp.int32)      # CSR pointers [M+1]

        # ---- Pallas kernel 2: segment mean of coords over the CSR segments ----
        n_tiles = max(1, pl.cdiv(n, _TN))
        n_pad2 = n_tiles * _TN
        m_blocks = max(1, pl.cdiv(m, _TM))
        m_pad = m_blocks * _TM
        sorted_coord = coord[sorted_idx]                               # [N, 3]
        coord4_t = (jnp.zeros((8, n_pad2), jnp.float32)
                    .at[:3, :n].set(sorted_coord.T)
                    .at[3, :n].set(1.0))                               # ones row -> counts
        ptr_lo = jnp.zeros((1, m_pad), jnp.int32).at[0, :m].set(idx_ptr[:-1])
        ptr_hi = jnp.zeros((1, m_pad), jnp.int32).at[0, :m].set(idx_ptr[1:])

        # per-M-block N-tile range (scalar prefetch) -> skip non-overlapping work
        ptr_np = np.asarray(idx_ptr)
        mb = np.arange(m_blocks, dtype=np.int64)
        p0 = ptr_np[np.minimum(mb * _TM, m)]
        p1 = ptr_np[np.minimum((mb + 1) * _TM, m)]
        t0 = p0 // _TN
        t1 = np.where(p1 > p0, (p1 - 1) // _TN, t0)
        nstart = t0.astype(np.int32)
        ncount = (t1 - t0 + 1).astype(np.int32)
        max_steps = int(ncount.max())

        out = segment_mean_sorted(coord4_t, ptr_lo, ptr_hi,
                                  jnp.asarray(nstart), jnp.asarray(ncount), max_steps)
        n_p = out[:3, :m].T                                            # [M, 3]

        # batch per voxel, then batch2offset (cumulative counts)
        vox_batch = batch[sorted_idx][idx_ptr[:-1]]
        n_o = jnp.cumsum(jnp.bincount(vox_batch, length=b)).astype(jnp.int32)

        # TODO(synk): argsort/unique/CSR construction has no Pallas equivalent on TPU;
        #             it stays in jnp (on device) with one host sync for the dynamic M.
        return (n_p, n_o, (sorted_idx.astype(jnp.int32), idx_ptr))


if __name__ == "__main__":
    rng = jax.random.PRNGKey(0)
    B = 2
    per_batch = [10, 6]
    N = sum(per_batch)
    coord = jax.random.uniform(rng, (N, 3), dtype=jnp.float32)         # points in [0, 1)^3
    offset = jnp.asarray(np.cumsum(per_batch), jnp.int32)              # [10, 16]

    model = VSampling(voxel_size=0.25)
    n_p, n_o, (idx, ptr) = model({'p': coord, 'o': offset})
    jax.block_until_ready(n_p)
    jax.block_until_ready(n_o)

    # reference checks in plain numpy
    c_np = np.asarray(coord)
    idx_np, ptr_np = np.asarray(idx), np.asarray(ptr)

    # (a) voxelization check: number of voxels matches a numpy reference
    batch_np = np.repeat(np.arange(B), per_batch)
    start_np = np.stack([c_np[batch_np == i].min(axis=0) for i in range(B)])
    g_np = np.floor((c_np - start_np[batch_np]) / 0.25).astype(np.int64)
    uniq = np.unique(np.concatenate([batch_np[:, None], g_np], axis=1), axis=0)
    assert n_p.shape[0] == uniq.shape[0], "voxel count mismatch"

    # (b) segment-mean check against the returned CSR clusters
    ref = np.stack([c_np[idx_np[ptr_np[i]:ptr_np[i + 1]]].mean(axis=0)
                    for i in range(len(ptr_np) - 1)])
    assert n_p.shape == ref.shape and n_p.shape[1] == 3
    assert np.allclose(np.asarray(n_p), ref, atol=1e-4), "segment mean mismatch"
    assert int(np.asarray(n_o)[-1]) == n_p.shape[0]

    print("KERNEL_OK")
</pallas_src>

<mosaic_0001>
module attributes {stable_mosaic.version = 11 : i64} {
  func.func @_grid_kernel(%arg0: i32, %arg1: memref<8x1024xf32, #tpu.memory_space<vmem>>, %arg2: memref<8x1024xf32, #tpu.memory_space<vmem>>, %arg3: memref<8x1024xi32, #tpu.memory_space<vmem>>) attributes {dimension_semantics = [#tpu.dimension_semantics<parallel>], iteration_bounds = array<i64: 1>, scalar_prefetch = 0 : i64, scratch_operands = 0 : i64, tpu.core_type = #tpu.core_type<tc>, window_params = [{transform_indices = @transform_0, window_bounds = array<i64: 8, 1024>}, {transform_indices = @transform_1, window_bounds = array<i64: 8, 1024>}, {transform_indices = @transform_2, window_bounds = array<i64: 8, 1024>}]} {
    %c0 = arith.constant 0 : index
    %c0_0 = arith.constant 0 : index
    %0 = vector.load %arg1[%c0, %c0_0] : memref<8x1024xf32, #tpu.memory_space<vmem>>, vector<8x1024xf32>
    %c0_1 = arith.constant 0 : index
    %c0_2 = arith.constant 0 : index
    %1 = vector.load %arg2[%c0_1, %c0_2] : memref<8x1024xf32, #tpu.memory_space<vmem>>, vector<8x1024xf32>
    %2 = arith.subf %0, %1 : vector<8x1024xf32>
    %cst = arith.constant 2.500000e-01 : f32
    %3 = vector.broadcast %cst : f32 to vector<8x1024xf32>
    %4 = arith.divf %2, %3 : vector<8x1024xf32>
    %5 = math.floor %4 : vector<8x1024xf32>
    %6 = arith.fptosi %5 : vector<8x1024xf32> to vector<8x1024xi32>
    %c0_3 = arith.constant 0 : index
    %c0_4 = arith.constant 0 : index
    %7 = vector.load %arg3[%c0_3, %c0_4] : memref<8x1024xi32, #tpu.memory_space<vmem>>, vector<8x1024xi32>
    tpu.vector_store %arg3[%c0_3, %c0_4], %6 {strides = array<i32>} : memref<8x1024xi32, #tpu.memory_space<vmem>>, vector<8x1024xi32>,
    return
  }
  func.func @transform_0(%arg0: i32) -> (i32, i32) {
    %c0_i32 = arith.constant 0 : i32
    %c0_i32_0 = arith.constant 0 : i32
    return %arg0, %c0_i32 : i32, i32
  }
  func.func @transform_1(%arg0: i32) -> (i32, i32) {
    %c0_i32 = arith.constant 0 : i32
    %c0_i32_0 = arith.constant 0 : i32
    return %arg0, %c0_i32 : i32, i32
  }
  func.func @transform_2(%arg0: i32) -> (i32, i32) {
    %c0_i32 = arith.constant 0 : i32
    %c0_i32_0 = arith.constant 0 : i32
    return %arg0, %c0_i32 : i32, i32
  }
}

</mosaic_0001>

<llo_original>
// kernel: tpu_custom_call.1
$region0: #{tpu_custom_call.1}
  #allocation0 [shape = 'u32[]', space=smem, size = 0x4, offset = 0x4, fixed_abs, tag = 'smem constant byte address 0x4 - core index']
  #allocation1 [shape = 'u32[144,128]{1,0:T(1,128)}', space=vmem, size = 0x12000, scoped, tag = 'internal scratch']
  %s0 = inlined_call_operand.hbm [shape: f32[8,1024], index: 0, kind: input, shape index: {}]
  %s1 = inlined_call_operand.hbm [shape: f32[8,1024], index: 1, kind: input, shape index: {}]
  %s2 = inlined_call_operand.hbm [shape: s32[8,1024], index: 2, kind: output, shape index: {}]
  %s3 = sld [smem:[#allocation0]]
  $region26: #{tpu_custom_call.1} parent=0
    _
  %s5 = ssub.s32 1, %s3
  %s6 = scalar_select 0, %s5, %s3
  $region1: #{tpu_custom_call.1} parent=0
    #allocation2 [shape = 'u8[32768]{0}', space=vmem, size = 0x8000, scoped, tag = 'input window, operand 0, single buffered']
    #allocation3 [shape = 's32[1]{0}', space=sflag, size = 0x4, scoped, tag = 'scoped memory for tpu_custom_call.1']
    #allocation4 [shape = 's32[1]{0}', space=sflag, size = 0x4, scoped, tag = 'scoped memory for tpu_custom_call.1']
    #allocation5 [shape = 'u8[32768]{0}', space=vmem, size = 0x8000, scoped, tag = 'input window, operand 1, single buffered']
    #allocation6 [shape = 's32[1]{0}', space=sflag, size = 0x4, scoped, tag = 'scoped memory for tpu_custom_call.1']
    #allocation7 [shape = 'u8[32768]{0}', space=vmem, size = 0x8000, scoped, tag = 'output window, operand 0, single buffered']
    %7 = vsyncpa [#allocation3], 0
    %8 = vsyncpa [#allocation6], 0
    %9 = vsyncpa [#allocation4], 0
    // Predicated region
    $region2: #{tpu_custom_call.1} parent=1 // pred_check
      _
    $region3: #{tpu_custom_call.1} parent=1 // pred_check_branch
      %11 = sbr.rel (0) target = $region5
    $region4: #{tpu_custom_call.1} parent=1 // pred_region
      %s13 = ssub.s32 1024, 1024
      %14 = vsyncadd [#allocation3], %s13
      %s16 = sshll.u32 [#allocation2], 4
      %s17 = int_to_ptr.vmem [resolvable:$true] %s16
      %19 = dma.hbm_to_vmem [thread:$0]  %s0, 1024, %s17, [#allocation3]
    $region5: #{tpu_custom_call.1} parent=1 // pred_fallthru
      _
    // Predicated region
    $region6: #{tpu_custom_call.1} parent=1 // pred_check
      _
    $region7: #{tpu_custom_call.1} parent=1 // pred_check_branch
      %21 = sbr.rel (0) target = $region9
    $region8: #{tpu_custom_call.1} parent=1 // pred_region
      %s23 = ssub.s32 1024, 1024
      %24 = vsyncadd [#allocation6], %s23
      %s26 = sshll.u32 [#allocation5], 4
      %s27 = int_to_ptr.vmem [resolvable:$true] %s26
      %29 = dma.hbm_to_vmem [thread:$0]  %s1, 1024, %s27, [#allocation6]
    $region9: #{tpu_custom_call.1} parent=1 // pred_fallthru
      _
    // Predicated region
    $region10: #{tpu_custom_call.1} parent=1 // pred_check
      _
    $region11: #{tpu_custom_call.1} parent=1 // pred_check_branch
      %31 = sbr.rel (0) target = $region13
    $region12: #{tpu_custom_call.1} parent=1 // pred_region
      %32 = dma.done [#allocation3], 1024
    $region13: #{tpu_custom_call.1} parent=1 // pred_fallthru
      _
    // Predicated region
    $region14: #{tpu_custom_call.1} parent=1 // pred_check
      _
    $region15: #{tpu_custom_call.1} parent=1 // pred_check_branch
      %34 = sbr.rel (0) target = $region17
    $region16: #{tpu_custom_call.1} parent=1 // pred_region
      %35 = dma.done [#allocation6], 1024
    $region17: #{tpu_custom_call.1} parent=1 // pred_fallthru
      _
    %v36 = vld [vmem:[#allocation2] sm:$0xff]
    %v37 = vld [vmem:[#allocation2 + $0x8] sm:$0xff]
    %v38 = vld [vmem:[#allocation2 + $0x10] sm:$0xff]
    %v39 = vld [vmem:[#allocation2 + $0x18] sm:$0xff]
    %v40 = vld [vmem:[#allocation2 + $0x20] sm:$0xff]
    %v41 = vld [vmem:[#allocation2 + $0x28] sm:$0xff]
    %v42 = vld [vmem:[#allocation2 + $0x30] sm:$0xff]
    %v43 = vld [vmem:[#allocation2 + $0x38] sm:$0xff]
    %v44 = vld [vmem:[#allocation5] sm:$0xff]
    %v45 = vld [vmem:[#allocation5 + $0x8] sm:$0xff]
    %v46 = vld [vmem:[#allocation5 + $0x10] sm:$0xff]
    %v47 = vld [vmem:[#allocation5 + $0x18] sm:$0xff]
    %v48 = vld [vmem:[#allocation5 + $0x20] sm:$0xff]
    %v49 = vld [vmem:[#allocation5 + $0x28] sm:$0xff]
    %v50 = vld [vmem:[#allocation5 + $0x30] sm:$0xff]
    %v51 = vld [vmem:[#allocation5 + $0x38] sm:$0xff]
    %v52 = vsub.f32 %v36, %v44
    %v53 = vsub.f32 %v37, %v45
    %v54 = vsub.f32 %v38, %v46
    %v55 = vsub.f32 %v39, %v47
    %v56 = vsub.f32 %v40, %v48
    %v57 = vsub.f32 %v41, %v49
    %v58 = vsub.f32 %v42, %v50
    %v59 = vsub.f32 %v43, %v51
    %v60 = vrcp.pop 0.25
    %v61 = vmul.f32 %v52, %v60
    %v62 = vmul.f32 %v53, %v60
    %v63 = vmul.f32 %v54, %v60
    %v64 = vmul.f32 %v55, %v60
    %v65 = vmul.f32 %v56, %v60
    %v66 = vmul.f32 %v57, %v60
    %v67 = vmul.f32 %v58, %v60
    %v68 = vmul.f32 %v59, %v60
    %v69 = vfloor.f32 %v61
    %v70 = vfloor.f32 %v62
    %v71 = vfloor.f32 %v63
    %v72 = vfloor.f32 %v64
    %v73 = vfloor.f32 %v65
    %v74 = vfloor.f32 %v66
    %v75 = vfloor.f32 %v67
    %v76 = vfloor.f32 %v68
    %v77 = vcvt.f32.s32.to.zero.pseudo %v69
    %v78 = vcvt.f32.s32.to.zero.pseudo %v70
    %v79 = vcvt.f32.s32.to.zero.pseudo %v71
    %v80 = vcvt.f32.s32.to.zero.pseudo %v72
    %v81 = vcvt.f32.s32.to.zero.pseudo %v73
    %v82 = vcvt.f32.s32.to.zero.pseudo %v74
    %v83 = vcvt.f32.s32.to.zero.pseudo %v75
    %v84 = vcvt.f32.s32.to.zero.pseudo %v76
    %85 = vst [vmem:[#allocation7] sm:$0xff] %v77
    %86 = vst [vmem:[#allocation7 + $0x8] sm:$0xff] %v78
    %87 = vst [vmem:[#allocation7 + $0x10] sm:$0xff] %v79
    %88 = vst [vmem:[#allocation7 + $0x18] sm:$0xff] %v80
    %89 = vst [vmem:[#allocation7 + $0x20] sm:$0xff] %v81
    %90 = vst [vmem:[#allocation7 + $0x28] sm:$0xff] %v82
    %91 = vst [vmem:[#allocation7 + $0x30] sm:$0xff] %v83
    %92 = vst [vmem:[#allocation7 + $0x38] sm:$0xff] %v84
    // Predicated region
    $region18: #{tpu_custom_call.1} parent=1 // pred_check
      _
    $region19: #{tpu_custom_call.1} parent=1 // pred_check_branch
      %94 = sbr.rel (0) target = $region21
    $region20: #{tpu_custom_call.1} parent=1 // pred_region
      %s96 = ssub.s32 1024, 1024
      %97 = vsyncadd [#allocation4], %s96
      %s99 = sshll.u32 [#allocation7], 4
      %s100 = int_to_ptr.vmem [resolvable:$true] %s99
      %102 = dma.vmem_to_hbm [thread:$0]  %s100, 1024, %s2, [#allocation4]
    $region21: #{tpu_custom_call.1} parent=1 // pred_fallthru
      _
    // Predicated region
    $region22: #{tpu_custom_call.1} parent=1 // pred_check
      _
    $region23: #{tpu_custom_call.1} parent=1 // pred_check_branch
      %104 = sbr.rel (0) target = $region25
    $region24: #{tpu_custom_call.1} parent=1 // pred_region
      %105 = dma.done [#allocation4], 1024
    $region25: #{tpu_custom_call.1} parent=1 // pred_fallthru
      _
    %106 = vsyncpa [#allocation3], 1
    %107 = vsyncpa [#allocation6], 1
    %108 = vsyncpa [#allocation4], 1

</llo_original>
